<compile_context>
chip_gen: v5e
topology: v5e:2x2
jax: 0.10.0
libtpu: 0.0.40
codegen_flags: <defaults>
</compile_context>

<pallas_src>
import jax
import jax.numpy as jnp
from jax import lax
from jax.experimental import pallas as pl
from jax.experimental.pallas import tpu as pltpu

# HP.layer_list is not provided in the spec snippet; the banknote-authentication
# dataset has 4 features and 2 classes, so use a small deterministic MLP spec.
HP_LAYER_LIST = [4, 32, 16, 2]


def _round_up(n, m):
    return ((n + m - 1) // m) * m


def _hbm_tile_bytes(shape, itemsize=4):
    """Bytes a 2-D f32 array occupies in TPU HBM's (8, 128)-tiled layout."""
    r, c = shape
    return _round_up(max(r, 1), 8) * _round_up(max(c, 1), 128) * itemsize


# -----------------------------------------------------------------------------
# Kernel: the entire MLP fused into one body.  Intermediates stay in vregs/VMEM.
# refs = (x, w0, b0, w1, b1, ..., out)
# -----------------------------------------------------------------------------
def _make_fused_mlp_kernel(num_layers):
    def kernel(*refs):
        x_ref = refs[0]
        o_ref = refs[-1]
        x = x_ref[...]                                        # (bb, in_dim)

        if num_layers == 1:
            w, b = refs[1][...], refs[2][...]                 # (out, in), (1, out)
            y = lax.dot_general(x, w, (((1,), (1,)), ((), ())),
                                preferred_element_type=jnp.float32)
            o_ref[...] = jnp.maximum(y + b, 0.0).astype(o_ref.dtype)
            return

        # Layer 0: h = relu(W0 @ x^T + b0) without materializing x^T.
        w0, b0 = refs[1][...], refs[2][...]                   # (o0, in), (o0, 1)
        h = lax.dot_general(w0, x, (((1,), (1,)), ((), ())),
                            preferred_element_type=jnp.float32)   # (o0, bb)
        h = jnp.maximum(h + b0, 0.0)

        # Middle layers stay feature-major: h <- relu(W_l @ h + b_l).
        for l in range(1, num_layers - 1):
            w, b = refs[1 + 2 * l][...], refs[2 + 2 * l][...]  # (ol, ol-1), (ol, 1)
            h = jnp.maximum(
                jnp.dot(w, h, preferred_element_type=jnp.float32) + b, 0.0)

        # Last layer contracts h's feature axis and lands batch-major, so the
        # store is directly (bb, out_dim): no transpose, no padded columns.
        wl = refs[1 + 2 * (num_layers - 1)][...]              # (oL, oL-1)
        bl = refs[2 + 2 * (num_layers - 1)][...]              # (1, oL)
        y = lax.dot_general(h, wl, (((0,), (1,)), ((), ())),
                            preferred_element_type=jnp.float32)   # (bb, oL)
        o_ref[...] = jnp.maximum(y + bl, 0.0).astype(o_ref.dtype)

    return kernel


# -----------------------------------------------------------------------------
# Parameter init (PyTorch nn.Linear default init) and one-time packing.
# -----------------------------------------------------------------------------
def init_params(key, layer_list):
    """nn.Linear-style params: W (out, in), b (out,), U(-1/sqrt(in), 1/sqrt(in))."""
    params = []
    for in_dim, out_dim in zip(layer_list[:-1], layer_list[1:]):
        key, kw, kb = jax.random.split(key, 3)
        bound = 1.0 / (in_dim ** 0.5)
        w = jax.random.uniform(kw, (out_dim, in_dim), jnp.float32,
                               minval=-bound, maxval=bound)
        b = jax.random.uniform(kb, (out_dim,), jnp.float32,
                               minval=-bound, maxval=bound)
        params.append((w, b))
    return params


def pack_params(params):
    """One-time packing (hoisted out of the forward): weights stay in their
    native (out, in) layout; biases become column vectors (out, 1) for the
    feature-major hidden layers and a row vector (1, out) for the batch-major
    final layer.  No transposes, no 128-lane padding."""
    n = len(params)
    packed = []
    for idx, (w, b) in enumerate(params):
        bp = b.reshape(1, -1) if idx == n - 1 else b.reshape(-1, 1)
        packed.append((jnp.asarray(w, jnp.float32), jnp.asarray(bp, jnp.float32)))
    return packed


# -----------------------------------------------------------------------------
# Fused forward pass (one pallas_call).
# -----------------------------------------------------------------------------
def banknote_forward(x, packed_params, *, block_b=2048, gridless_max_rows=4096):
    B, in_dim = x.shape
    num_layers = len(packed_params)
    out_dim = packed_params[-1][0].shape[0]
    flat = [a for wb in packed_params for a in wb]
    kernel = _make_fused_mlp_kernel(num_layers)

    flops = int(2 * B * sum(w.shape[0] * w.shape[1] for w, _ in packed_params))
    bytes_accessed = int(_hbm_tile_bytes((B, in_dim)) + _hbm_tile_bytes((B, out_dim))
                         + sum(_hbm_tile_bytes(a.shape) for a in flat))
    cost = pl.CostEstimate(flops=flops, transcendentals=0,
                           bytes_accessed=bytes_accessed)

    if B <= gridless_max_rows:
        # Small/medium batch: gridless whole-array kernel (no per-step pipeline
        # bookkeeping).  ~1 KB of VMEM per row -> <= ~4-5 MB at the ceiling,
        # well under every generation's scoped-VMEM default (v5e: 16 MiB).
        vmem = pl.BlockSpec(memory_space=pltpu.MemorySpace.VMEM)
        return pl.pallas_call(
            kernel,
            out_shape=jax.ShapeDtypeStruct((B, out_dim), jnp.float32),
            in_specs=[vmem] * (1 + 2 * num_layers),
            out_specs=vmem,
            compiler_params=pltpu.CompilerParams(
                vmem_limit_bytes=32 * 1024 * 1024),
            cost_estimate=cost,
        )(x, *flat)

    # Large batch: tile the batch axis.  Cap the block so there are at least
    # TWO blocks -> the "parallel" axis shards across v7x's 2 TensorCores.
    # Weights/biases stay VMEM-resident via grid-invariant index maps (0, 0)
    # (Pallas does not re-issue their DMAs when the block index is unchanged).
    bb = min(block_b, _round_up((B + 1) // 2, 8))
    n_blocks = pl.cdiv(B, bb)
    in_specs = [pl.BlockSpec((bb, in_dim), lambda i: (i, 0))]
    for w, bvec in packed_params:
        in_specs.append(pl.BlockSpec(w.shape, lambda i: (0, 0)))
        in_specs.append(pl.BlockSpec(bvec.shape, lambda i: (0, 0)))
    return pl.pallas_call(
        kernel,
        out_shape=jax.ShapeDtypeStruct((B, out_dim), jnp.float32),
        grid_spec=pltpu.PrefetchScalarGridSpec(
            num_scalar_prefetch=0,
            grid=(n_blocks,),
            in_specs=in_specs,
            out_specs=pl.BlockSpec((bb, out_dim), lambda i: (i, 0)),
        ),
        compiler_params=pltpu.CompilerParams(
            dimension_semantics=("parallel",),
            vmem_limit_bytes=32 * 1024 * 1024),
        cost_estimate=cost,
    )(x, *flat)


if __name__ == "__main__":
    key = jax.random.PRNGKey(0)
    key, kx1, kx2, kx3 = jax.random.split(key, 4)

    params = init_params(key, HP_LAYER_LIST)   # PyTorch-layout reference params
    packed = pack_params(params)               # one-time layout packing
    out_dim = HP_LAYER_LIST[-1]

    def reference(x):
        h = x
        for w, b in params:
            h = jnp.maximum(h @ w.T + b, 0.0)  # relu after every layer, incl. last
        return h

    # 1) Tiny batch -> gridless fused kernel.
    x_small = jax.random.normal(kx1, (8, HP_LAYER_LIST[0]), jnp.float32)
    out_small = banknote_forward(x_small, packed)
    jax.block_until_ready(out_small)
    assert out_small.shape == (8, out_dim)
    assert bool(jnp.all(out_small >= 0.0))
    assert bool(jnp.allclose(out_small, reference(x_small), atol=1e-5, rtol=1e-5))

    # 2) Medium batch, forced onto the grid path with exactly 2 parallel blocks
    #    (both TensorCores on v7x get work).
    x_mid = jax.random.normal(kx2, (4096, HP_LAYER_LIST[0]), jnp.float32)
    out_mid = banknote_forward(x_mid, packed, block_b=2048, gridless_max_rows=2048)
    jax.block_until_ready(out_mid)
    assert out_mid.shape == (4096, out_dim)
    assert bool(jnp.all(out_mid >= 0.0))
    assert bool(jnp.allclose(out_mid, reference(x_mid), atol=1e-5, rtol=1e-5))

    # 3) Larger, non-divisible batch -> grid path with a ragged last block
    #    (no wrapper-side jnp.pad, no post-kernel slice).
    x_big = jax.random.normal(kx3, (5000, HP_LAYER_LIST[0]), jnp.float32)
    out_big = banknote_forward(x_big, packed)
    jax.block_until_ready(out_big)
    assert out_big.shape == (5000, out_dim)
    assert bool(jnp.all(out_big >= 0.0))
    assert bool(jnp.allclose(out_big, reference(x_big), atol=1e-5, rtol=1e-5))

    print("KERNEL_OK")
</pallas_src>

<mosaic_0001>
module attributes {stable_mosaic.version = 11 : i64} {
  func.func @kernel(%arg0: memref<8x4xf32, #tpu.memory_space<vmem>>, %arg1: memref<32x4xf32, #tpu.memory_space<vmem>>, %arg2: memref<32x1xf32, #tpu.memory_space<vmem>>, %arg3: memref<16x32xf32, #tpu.memory_space<vmem>>, %arg4: memref<16x1xf32, #tpu.memory_space<vmem>>, %arg5: memref<2x16xf32, #tpu.memory_space<vmem>>, %arg6: memref<1x2xf32, #tpu.memory_space<vmem>>, %arg7: memref<8x2xf32, #tpu.memory_space<vmem>>) attributes {dimension_semantics = [], scalar_prefetch = 0 : i64, scratch_operands = 0 : i64, tpu.core_type = #tpu.core_type<tc>} {
    %c0 = arith.constant 0 : index
    %c0_0 = arith.constant 0 : index
    %0 = vector.load %arg0[%c0, %c0_0] : memref<8x4xf32, #tpu.memory_space<vmem>>, vector<8x4xf32>
    %c0_1 = arith.constant 0 : index
    %c0_2 = arith.constant 0 : index
    %1 = vector.load %arg1[%c0_1, %c0_2] : memref<32x4xf32, #tpu.memory_space<vmem>>, vector<32x4xf32>
    %c0_3 = arith.constant 0 : index
    %c0_4 = arith.constant 0 : index
    %2 = vector.load %arg2[%c0_3, %c0_4] : memref<32x1xf32, #tpu.memory_space<vmem>>, vector<32x1xf32>
    %cst = arith.constant dense<0.000000e+00> : vector<32x8xf32>
    %3 = tpu.matmul %1, %0, %cst {dimension_numbers = #tpu.dot_dimension_numbers<[1], [1], [0], [0], [0, 0, 1, 0], [], []>} : vector<32x4xf32>, vector<8x4xf32>, vector<32x8xf32> -> vector<32x8xf32>
    %4 = vector.broadcast %2 : vector<32x1xf32> to vector<32x8xf32>
    %5 = arith.addf %3, %4 : vector<32x8xf32>
    %cst_5 = arith.constant 0.000000e+00 : f32
    %6 = vector.broadcast %cst_5 : f32 to vector<32x8xf32>
    %7 = arith.maximumf %5, %6 : vector<32x8xf32>
    %c0_6 = arith.constant 0 : index
    %c0_7 = arith.constant 0 : index
    %8 = vector.load %arg3[%c0_6, %c0_7] : memref<16x32xf32, #tpu.memory_space<vmem>>, vector<16x32xf32>
    %c0_8 = arith.constant 0 : index
    %c0_9 = arith.constant 0 : index
    %9 = vector.load %arg4[%c0_8, %c0_9] : memref<16x1xf32, #tpu.memory_space<vmem>>, vector<16x1xf32>
    %cst_10 = arith.constant dense<0.000000e+00> : vector<16x8xf32>
    %10 = tpu.matmul %8, %7, %cst_10 {dimension_numbers = #tpu.dot_dimension_numbers<[1], [0], [0], [1], [0, 0, 1, 1], [], []>} : vector<16x32xf32>, vector<32x8xf32>, vector<16x8xf32> -> vector<16x8xf32>
    %11 = vector.broadcast %9 : vector<16x1xf32> to vector<16x8xf32>
    %12 = arith.addf %10, %11 : vector<16x8xf32>
    %cst_11 = arith.constant 0.000000e+00 : f32
    %13 = vector.broadcast %cst_11 : f32 to vector<16x8xf32>
    %14 = arith.maximumf %12, %13 : vector<16x8xf32>
    %c0_12 = arith.constant 0 : index
    %c0_13 = arith.constant 0 : index
    %15 = vector.load %arg5[%c0_12, %c0_13] : memref<2x16xf32, #tpu.memory_space<vmem>>, vector<2x16xf32>
    %c0_14 = arith.constant 0 : index
    %c0_15 = arith.constant 0 : index
    %16 = vector.load %arg6[%c0_14, %c0_15] : memref<1x2xf32, #tpu.memory_space<vmem>>, vector<1x2xf32>
    %cst_16 = arith.constant dense<0.000000e+00> : vector<8x2xf32>
    %17 = tpu.matmul %14, %15, %cst_16 {dimension_numbers = #tpu.dot_dimension_numbers<[0], [1], [1], [0], [0, 1, 1, 0], [], []>} : vector<16x8xf32>, vector<2x16xf32>, vector<8x2xf32> -> vector<8x2xf32>
    %18 = vector.broadcast %16 : vector<1x2xf32> to vector<8x2xf32>
    %19 = arith.addf %17, %18 : vector<8x2xf32>
    %cst_17 = arith.constant 0.000000e+00 : f32
    %20 = vector.broadcast %cst_17 : f32 to vector<8x2xf32>
    %21 = arith.maximumf %19, %20 : vector<8x2xf32>
    %c0_18 = arith.constant 0 : index
    %c0_19 = arith.constant 0 : index
    %22 = vector.load %arg7[%c0_18, %c0_19] : memref<8x2xf32, #tpu.memory_space<vmem>>, vector<8x2xf32>
    tpu.vector_store %arg7[%c0_18, %c0_19], %21 {strides = array<i32>} : memref<8x2xf32, #tpu.memory_space<vmem>>, vector<8x2xf32>,
    return
  }
}

</mosaic_0001>

<llo_original>
// kernel: tpu_custom_call.1
$region0: #{tpu_custom_call.1}
  #allocation0 [shape = 'u32[]', space=smem, size = 0x4, offset = 0x4, fixed_abs, tag = 'smem constant byte address 0x4 - core index']
  #allocation1 [shape = 'u32[72,128]{1,0:T(1,128)}', space=vmem, size = 0x9000, scoped, tag = 'internal scratch']
  %s0 = inlined_call_operand.vmem [shape: f32[8,4], index: 0, kind: input, shape index: {}]
  %s1 = inlined_call_operand.vmem [shape: f32[32,4], index: 1, kind: input, shape index: {}]
  %s2 = inlined_call_operand.vmem [shape: f32[32,1], index: 2, kind: input, shape index: {}]
  %s3 = inlined_call_operand.vmem [shape: f32[16,32], index: 3, kind: input, shape index: {}]
  %s4 = inlined_call_operand.vmem [shape: f32[16,1], index: 4, kind: input, shape index: {}]
  %s5 = inlined_call_operand.vmem [shape: f32[2,16], index: 5, kind: input, shape index: {}]
  %s6 = inlined_call_operand.vmem [shape: f32[1,2], index: 6, kind: input, shape index: {}]
  %s7 = inlined_call_operand.vmem [shape: f32[8,2], index: 7, kind: output, shape index: {}]
  %s8 = sld [smem:[#allocation0]]
  $region38: #{tpu_custom_call.1} parent=0
    _
  %s10 = ssub.s32 1, %s8
  %s11 = scalar_select 0, %s10, %s8
  // Predicated region
  $region2: #{tpu_custom_call.1} parent=0 // pred_check
    _
  $region3: #{tpu_custom_call.1} parent=0 // pred_check_branch
    %13 = sbr.rel (0) target = $region5
  $region4: #{tpu_custom_call.1} parent=0 // pred_region
    _
  $region5: #{tpu_custom_call.1} parent=0 // pred_fallthru
    _
  // Predicated region
  $region6: #{tpu_custom_call.1} parent=0 // pred_check
    _
  $region7: #{tpu_custom_call.1} parent=0 // pred_check_branch
    %15 = sbr.rel (0) target = $region9
  $region8: #{tpu_custom_call.1} parent=0 // pred_region
    _
  $region9: #{tpu_custom_call.1} parent=0 // pred_fallthru
    _
  // Predicated region
  $region10: #{tpu_custom_call.1} parent=0 // pred_check
    _
  $region11: #{tpu_custom_call.1} parent=0 // pred_check_branch
    %17 = sbr.rel (0) target = $region13
  $region12: #{tpu_custom_call.1} parent=0 // pred_region
    _
  $region13: #{tpu_custom_call.1} parent=0 // pred_fallthru
    _
  // Predicated region
  $region14: #{tpu_custom_call.1} parent=0 // pred_check
    _
  $region15: #{tpu_custom_call.1} parent=0 // pred_check_branch
    %19 = sbr.rel (0) target = $region17
  $region16: #{tpu_custom_call.1} parent=0 // pred_region
    _
  $region17: #{tpu_custom_call.1} parent=0 // pred_fallthru
    _
  // Predicated region
  $region18: #{tpu_custom_call.1} parent=0 // pred_check
    _
  $region19: #{tpu_custom_call.1} parent=0 // pred_check_branch
    %21 = sbr.rel (0) target = $region21
  $region20: #{tpu_custom_call.1} parent=0 // pred_region
    _
  $region21: #{tpu_custom_call.1} parent=0 // pred_fallthru
    _
  // Predicated region
  $region22: #{tpu_custom_call.1} parent=0 // pred_check
    _
  $region23: #{tpu_custom_call.1} parent=0 // pred_check_branch
    %23 = sbr.rel (0) target = $region25
  $region24: #{tpu_custom_call.1} parent=0 // pred_region
    _
  $region25: #{tpu_custom_call.1} parent=0 // pred_fallthru
    _
  // Predicated region
  $region26: #{tpu_custom_call.1} parent=0 // pred_check
    _
  $region27: #{tpu_custom_call.1} parent=0 // pred_check_branch
    %25 = sbr.rel (0) target = $region29
  $region28: #{tpu_custom_call.1} parent=0 // pred_region
    _
  $region29: #{tpu_custom_call.1} parent=0 // pred_fallthru
    _
  %v26 = vld [vmem:[%s0] sm:$0xff]
  %v27 = vld [vmem:[%s1] sm:$0xff]
  %v28 = vld [vmem:[%s1 + $0x8] sm:$0xff]
  %v29 = vld [vmem:[%s1 + $0x10] sm:$0xff]
  %v30 = vld [vmem:[%s1 + $0x18] sm:$0xff]
  %v31 = vld [vmem:[%s2] sm:$0xff]
  %v32 = vld [vmem:[%s2 + $0x8] sm:$0xff]
  %v33 = vld [vmem:[%s2 + $0x10] sm:$0xff]
  %v34 = vld [vmem:[%s2 + $0x18] sm:$0xff]
  %36 = vset.pattern.permute.xlu0 0
  %37 = vperm.xlu0 %36, %v31
  %v38 = vpop.permute.xlu0 %37
  %41 = vset.pattern.permute.xlu0 0
  %42 = vperm.xlu0 %41, %v32
  %v43 = vpop.permute.xlu0 %42
  %46 = vset.pattern.permute.xlu0 0
  %47 = vperm.xlu0 %46, %v33
  %v48 = vpop.permute.xlu0 %47
  %51 = vset.pattern.permute.xlu0 0
  %52 = vperm.xlu0 %51, %v34
  %v53 = vpop.permute.xlu0 %52
  %vm55 = vcmask 31744
  %v57 = vsel %vm55, %v27, 0
  %v60 = vsel %vm55, %v28, 0
  %v63 = vsel %vm55, %v29, 0
  %v66 = vsel %vm55, %v30, 0
  %v69 = vsel %vm55, %v26, 0
  %71 = vmatpush.xpose.msra.mxu0 0.0
  %72 = vmatpush.xpose.msra.mxu0 0.0
  %73 = vmatpush.xpose.msra.mxu0 0.0
  %74 = vmatpush.xpose.msra.mxu0 0.0
  %75 = vmatpush.xpose.msra.mxu0 0.0
  %76 = vmatpush.xpose.msra.mxu0 0.0
  %77 = vmatpush.xpose.msra.mxu0 0.0
  %78 = vmatpush.xpose.msra.mxu0 0.0
  %79 = vmatpush.xpose.msra.mxu0 0.0
  %80 = vmatpush.xpose.msra.mxu0 0.0
  %81 = vmatpush.xpose.msra.mxu0 0.0
  %82 = vmatpush.xpose.msra.mxu0 0.0
  %83 = vmatpush.xpose.msra.mxu0 0.0
  %84 = vmatpush.xpose.msra.mxu0 0.0
  %85 = vmatpush.xpose.msra.mxu0 0.0
  %86 = vmatpush.xpose.msra.mxu0 %v69
  %87 = vmatmul.f32.gmra.mxu0 %v57
  %v88 = vpop.f32.mrf.mxu0
  %v89 = vadd.f32 %v38, %v88
  %90 = vmatmul.f32.gmra.mxu0 %v60
  %v91 = vpop.f32.mrf.mxu0
  %v92 = vadd.f32 %v43, %v91
  %93 = vmatmul.f32.gmra.mxu0 %v63
  %v94 = vpop.f32.mrf.mxu0
  %v95 = vadd.f32 %v48, %v94
  %96 = vmatmul.f32.gmra.mxu0 %v66
  %v97 = vpop.f32.mrf.mxu0
  %v98 = vadd.f32 %v53, %v97
  %99 = vdwg.mxu0
  %v100 = vmax.f32 %v89, 0.0
  %v101 = vmax.f32 %v92, 0.0
  %v102 = vmax.f32 %v95, 0.0
  %v103 = vmax.f32 %v98, 0.0
  %v104 = vld [vmem:[%s3] sm:$0xff]
  %v105 = vld [vmem:[%s3 + $0x8] sm:$0xff]
  %v106 = vld [vmem:[%s4] sm:$0xff]
  %v107 = vld [vmem:[%s4 + $0x8] sm:$0xff]
  %109 = vset.pattern.permute.xlu0 0
  %110 = vperm.xlu0 %109, %v106
  %v111 = vpop.permute.xlu0 %110
  %114 = vset.pattern.permute.xlu0 0
  %115 = vperm.xlu0 %114, %v107
  %v116 = vpop.permute.xlu0 %115
  %vm118 = vcmask 261120
  %v120 = vsel %vm118, %v104, 0
  %v123 = vsel %vm118, %v105, 0
  %125 = vmatpush.msra.mxu0 0.0
  %126 = vmatpush.msra.mxu0 0.0
  %127 = vmatpush.msra.mxu0 0.0
  %128 = vmatpush.msra.mxu0 0.0
  %129 = vmatpush.msra.mxu0 0.0
  %130 = vmatpush.msra.mxu0 0.0
  %131 = vmatpush.msra.mxu0 0.0
  %132 = vmatpush.msra.mxu0 0.0
  %133 = vmatpush.msra.mxu0 0.0
  %134 = vmatpush.msra.mxu0 0.0
  %135 = vmatpush.msra.mxu0 0.0
  %136 = vmatpush.msra.mxu0 0.0
  %137 = vmatpush.msra.mxu0 %v103
  %138 = vmatpush.msra.mxu0 %v102
  %139 = vmatpush.msra.mxu0 %v101
  %140 = vmatpush.msra.mxu0 %v100
  %141 = vmatmul.f32.gmra.mxu0 %v120
  %v142 = vpop.f32.mrf.mxu0
  %v143 = vadd.f32 %v111, %v142
  %144 = vmatmul.f32.gmra.mxu0 %v123
  %v145 = vpop.f32.mrf.mxu0
  %v146 = vadd.f32 %v116, %v145
  %147 = vdwg.mxu0
  %v148 = vmax.f32 %v143, 0.0
  %v149 = vmax.f32 %v146, 0.0
  %v150 = vld [vmem:[%s5] sm:$0x3]
  %v151 = vld [vmem:[%s6] sm:$0x1]
  %v153 = vperm.slane %v151, 0
  %155 = vxpose.xlu0.b32.start [1/16] %v148, 128
  %156 = vxpose.xlu0.b32.cont [2/16] %v149, 128
  %157 = vxpose.xlu0.b32.cont [3/16] 0.0, 128
  %158 = vxpose.xlu0.b32.cont [4/16] 0.0, 128
  %159 = vxpose.xlu0.b32.cont [5/16] 0.0, 128
  %160 = vxpose.xlu0.b32.cont [6/16] 0.0, 128
  %161 = vxpose.xlu0.b32.cont [7/16] 0.0, 128
  %162 = vxpose.xlu0.b32.cont [8/16] 0.0, 128
  %163 = vxpose.xlu0.b32.cont [9/16] 0.0, 128
  %164 = vxpose.xlu0.b32.cont [10/16] 0.0, 128
  %165 = vxpose.xlu0.b32.cont [11/16] 0.0, 128
  %166 = vxpose.xlu0.b32.cont [12/16] 0.0, 128
  %167 = vxpose.xlu0.b32.cont [13/16] 0.0, 128
  %168 = vxpose.xlu0.b32.cont [14/16] 0.0, 128
  %169 = vxpose.xlu0.b32.cont [15/16] 0.0, 128
  %170 = vxpose.xlu0.b32.end [16/16] 0.0, 128
  %v171 = vpop.trf.xlu0
  %v172 = vpop.trf.xlu0
  %v173 = vpop.trf.xlu0
  %v174 = vpop.trf.xlu0
  %v175 = vpop.trf.xlu0
  %v176 = vpop.trf.xlu0
  %v177 = vpop.trf.xlu0
  %v178 = vpop.trf.xlu0
  %v179 = vpop.trf.xlu0
  %v180 = vpop.trf.xlu0
  %v181 = vpop.trf.xlu0
  %v182 = vpop.trf.xlu0
  %v183 = vpop.trf.xlu0
  %v184 = vpop.trf.xlu0
  %v185 = vpop.trf.xlu0
  %v186 = vpop.trf.xlu0
  %vm187 = vcmask 130048
  %v189 = vsel %vm187, %v171, 0
  %v192 = vsel %vm187, %v150, 0
  %194 = vmatpush.xpose.msra.mxu0 0.0
  %195 = vmatpush.xpose.msra.mxu0 0.0
  %196 = vmatpush.xpose.msra.mxu0 0.0
  %197 = vmatpush.xpose.msra.mxu0 0.0
  %198 = vmatpush.xpose.msra.mxu0 0.0
  %199 = vmatpush.xpose.msra.mxu0 0.0
  %200 = vmatpush.xpose.msra.mxu0 0.0
  %201 = vmatpush.xpose.msra.mxu0 0.0
  %202 = vmatpush.xpose.msra.mxu0 0.0
  %203 = vmatpush.xpose.msra.mxu0 0.0
  %204 = vmatpush.xpose.msra.mxu0 0.0
  %205 = vmatpush.xpose.msra.mxu0 0.0
  %206 = vmatpush.xpose.msra.mxu0 0.0
  %207 = vmatpush.xpose.msra.mxu0 0.0
  %208 = vmatpush.xpose.msra.mxu0 0.0
  %209 = vmatpush.xpose.msra.mxu0 %v192
  %210 = vmatmul.f32.gmra.mxu0 %v189
  %v211 = vpop.f32.mrf.mxu0
  %v212 = vadd.f32 %v153, %v211
  %213 = vdwg.mxu0
  %v214 = vmax.f32 %v212, 0.0
  %vm215 = vcmask 15360
  %216 = vst.msk [vmem:[%s7] sm:$0xff] %vm215, %v214
  // Predicated region
  $region30: #{tpu_custom_call.1} parent=0 // pred_check
    _
  $region31: #{tpu_custom_call.1} parent=0 // pred_check_branch
    %218 = sbr.rel (0) target = $region33
  $region32: #{tpu_custom_call.1} parent=0 // pred_region
    _
  $region33: #{tpu_custom_call.1} parent=0 // pred_fallthru
    _
  // Predicated region
  $region34: #{tpu_custom_call.1} parent=0 // pred_check
    _
  $region35: #{tpu_custom_call.1} parent=0 // pred_check_branch
    %220 = sbr.rel (0) target = $region37
  $region36: #{tpu_custom_call.1} parent=0 // pred_region
    _
  $region37: #{tpu_custom_call.1} parent=0 // pred_fallthru
    _

</llo_original>
